<compile_context>
chip_gen: v5e
topology: v5e:2x2
jax: 0.10.0
libtpu: 0.0.40
codegen_flags: <defaults>
</compile_context>

<pallas_src>
import jax
import jax.numpy as jnp
from jax.experimental import pallas as pl
from jax.experimental.pallas import tpu as pltpu


def _round_up(x, m):
    return ((x + m - 1) // m) * m


# ----------------------------------------------------------------------------
# Kernel body: one batch tile -> fc1+relu -> fc2+relu -> fused (pi|V|pad) head
# ----------------------------------------------------------------------------
def actor_critic_kernel(x_ref, w1_ref, w2_ref, wh_ref, b12_ref, bh_ref, out_ref):
    fc1 = w1_ref.shape[1]
    fc2 = w2_ref.shape[1]

    # fc1 + relu  (bf16 operands, f32 accumulate, bias add in f32)
    x = x_ref[...]
    h1 = jnp.dot(x, w1_ref[...], preferred_element_type=jnp.float32)
    h1 = jnp.maximum(h1 + b12_ref[0:1, :fc1], 0.0)

    # fc2 + relu
    h2 = jnp.dot(h1.astype(jnp.bfloat16), w2_ref[...],
                 preferred_element_type=jnp.float32)
    h2 = jnp.maximum(h2 + b12_ref[1:2, :fc2], 0.0)

    # fused (pi | V | zero-pad) head -> lane-dense 128-wide output slab.
    out = jnp.dot(h2.astype(jnp.bfloat16), wh_ref[...],
                  preferred_element_type=jnp.float32)
    # bias add in f32, store bf16 (halves the dominant HBM writeback stream)
    out_ref[...] = (out + bh_ref[...]).astype(out_ref.dtype)


# ----------------------------------------------------------------------------
# One-time parameter repacking (do NOT call this per forward step)
# ----------------------------------------------------------------------------
def prepare_params(params):
    """Repack PyTorch-style params into kernel operands. Call once; reuse."""
    w1, b1 = params["w1"], params["b1"]
    w2, b2 = params["w2"], params["b2"]
    wpi, bpi = params["wpi"], params["bpi"]
    wv, bv = params["wv"], params["bv"]
    fc1, fc2 = w1.shape[1], w2.shape[1]
    n_actions = wpi.shape[1]

    # lane-dense head width; guard that pi + V actually fit.
    head_pad = max(128, _round_up(n_actions + 1, 128))
    assert n_actions + 1 <= head_pad

    # fuse the two heads into one (fc2, head_pad) weight / (1, head_pad) bias
    wh = jnp.zeros((fc2, head_pad), jnp.float32)
    wh = wh.at[:, :n_actions].set(wpi)
    wh = wh.at[:, n_actions:n_actions + 1].set(wv)
    bh = jnp.zeros((1, head_pad), jnp.float32)
    bh = bh.at[:, :n_actions].set(bpi)
    bh = bh.at[:, n_actions:n_actions + 1].set(bv)

    # pack b1 / b2 into one (2, max(fc1, fc2)) array (one fewer DMA)
    fcmax = max(fc1, fc2)
    b12 = jnp.zeros((2, fcmax), jnp.float32)
    b12 = b12.at[0, :fc1].set(b1[0])
    b12 = b12.at[1, :fc2].set(b2[0])

    prep = dict(
        w1_bf=w1.astype(jnp.bfloat16),
        w2_bf=w2.astype(jnp.bfloat16),
        wh_bf=wh.astype(jnp.bfloat16),
        b12=b12,
        bh=bh,
    )
    # commit the repacked operands to device once
    prep = jax.tree_util.tree_map(jax.device_put, prep)
    return prep, n_actions


def _num_tensorcores():
    """Best-effort per-chip TensorCore count (v7x=2, v5e/v6e=1)."""
    try:
        d = jax.devices()[0]
        nc = getattr(d, "num_cores", None)
        if nc:
            return int(nc)
        kind = str(getattr(d, "device_kind", "")).lower()
        if "v7" in kind:
            return 2
    except Exception:
        pass
    return 1


def _tiling(batch, num_tc, max_tile):
    """Pick (tile_b, padded_batch): few big tiles on 1-TC chips, an even
    tile count on 2-TC chips, minimal batch padding in both cases."""
    b8 = _round_up(max(batch, 8), 8)
    tiles = pl.cdiv(b8, max_tile)
    if num_tc >= 2:
        if tiles < 2:
            tiles = 2
        elif tiles % 2:
            tiles += 1
    tb = _round_up(pl.cdiv(b8, tiles), 8)
    return tb, tb * tiles


# ----------------------------------------------------------------------------
# Forward wrapper
# ----------------------------------------------------------------------------
def actor_critic_forward(state, prep, *, n_actions, num_tc=1, max_tile=2048):
    """Fused fc1->relu->fc2->relu->{pi, V} forward in one Pallas kernel.

    `prep` must come from prepare_params(); `n_actions`, `num_tc`, `max_tile`
    are static (compile-time) arguments.
    """
    B, d_in = state.shape
    fc1 = prep["w1_bf"].shape[1]
    fc2 = prep["w2_bf"].shape[1]
    head_pad = prep["wh_bf"].shape[1]
    fcmax = prep["b12"].shape[1]

    x_bf = state.astype(jnp.bfloat16)

    tb, b_pad = _tiling(B, num_tc, max_tile)
    if b_pad != B:
        x_bf = jnp.pad(x_bf, ((0, b_pad - B), (0, 0)))
    grid = (b_pad // tb,)

    out = pl.pallas_call(
        actor_critic_kernel,
        out_shape=jax.ShapeDtypeStruct((b_pad, head_pad), jnp.bfloat16),
        grid_spec=pltpu.PrefetchScalarGridSpec(
            num_scalar_prefetch=0,
            grid=grid,
            in_specs=[
                pl.BlockSpec((tb, d_in), lambda i: (i, 0)),       # x (tiled)
                pl.BlockSpec((d_in, fc1), lambda i: (0, 0)),      # w1 (resident)
                pl.BlockSpec((fc1, fc2), lambda i: (0, 0)),       # w2 (resident)
                pl.BlockSpec((fc2, head_pad), lambda i: (0, 0)),  # fused head W
                pl.BlockSpec((2, fcmax), lambda i: (0, 0)),       # packed b1|b2
                pl.BlockSpec((1, head_pad), lambda i: (0, 0)),    # fused head b
            ],
            out_specs=pl.BlockSpec((tb, head_pad), lambda i: (i, 0)),
        ),
        compiler_params=pltpu.CompilerParams(
            dimension_semantics=("parallel",)),
    )(x_bf, prep["w1_bf"], prep["w2_bf"], prep["wh_bf"], prep["b12"], prep["bh"])

    out = out[:B].astype(jnp.float32)
    pi = out[:, :n_actions]
    v = out[:, n_actions:n_actions + 1]
    return pi, v


# ----------------------------------------------------------------------------
# Init / reference (forward-pass semantics of the PyTorch module)
# ----------------------------------------------------------------------------
def init_params(key, input_dim, n_actions, fc1_dims=256, fc2_dims=256):
    """Deterministic init mimicking nn.Linear's U(-1/sqrt(fan_in), 1/sqrt(fan_in))."""
    def linear(k, fan_in, fan_out):
        kw, kb = jax.random.split(k)
        bound = 1.0 / jnp.sqrt(jnp.float32(fan_in))
        # stored transposed relative to PyTorch: (in, out)
        w = jax.random.uniform(kw, (fan_in, fan_out), jnp.float32, -bound, bound)
        b = jax.random.uniform(kb, (1, fan_out), jnp.float32, -bound, bound)
        return w, b

    k1, k2, k3, k4 = jax.random.split(key, 4)
    w1, b1 = linear(k1, input_dim, fc1_dims)
    w2, b2 = linear(k2, fc1_dims, fc2_dims)
    wpi, bpi = linear(k3, fc2_dims, n_actions)
    wv, bv = linear(k4, fc2_dims, 1)
    return dict(w1=w1, b1=b1, w2=w2, b2=b2, wpi=wpi, bpi=bpi, wv=wv, bv=bv)


def reference_forward(state, p):
    h1 = jnp.maximum(state @ p["w1"] + p["b1"], 0.0)
    h2 = jnp.maximum(h1 @ p["w2"] + p["b2"], 0.0)
    return h2 @ p["wpi"] + p["bpi"], h2 @ p["wv"] + p["bv"]


if __name__ == "__main__":
    key = jax.random.PRNGKey(0)
    k_params, k_state_small, k_state_big = jax.random.split(key, 3)

    input_dim = 8      # input_dims = (8,)
    n_actions_cfg = 4
    fc1_dims = 256
    fc2_dims = 256

    params = init_params(k_params, input_dim, n_actions_cfg, fc1_dims, fc2_dims)
    prep, n_actions = prepare_params(params)   # one-time repack + bf16 cast
    num_tc = _num_tensorcores()

    fwd = jax.jit(actor_critic_forward,
                  static_argnames=("n_actions", "num_tc", "max_tile"))

    # bf16 matmul operands + bf16 output store (f32 accumulate) -> loosened tol.
    TOL = dict(atol=2e-2, rtol=2e-2)

    # --- small batch (latency-bound path) ------------------------------------
    batch = 8
    state = jax.random.normal(k_state_small, (batch, input_dim), jnp.float32)
    pi, v = fwd(state, prep, n_actions=n_actions, num_tc=num_tc)
    jax.block_until_ready((pi, v))
    pi_ref, v_ref = reference_forward(state, params)
    assert pi.shape == (batch, n_actions) and v.shape == (batch, 1)
    assert jnp.allclose(pi, pi_ref, **TOL)
    assert jnp.allclose(v, v_ref, **TOL)

    # --- larger batch (exercises the batch-tiled grid path) ------------------
    batch_big = 512
    state_big = jax.random.normal(k_state_big, (batch_big, input_dim), jnp.float32)
    pi_b, v_b = fwd(state_big, prep, n_actions=n_actions, num_tc=num_tc)
    jax.block_until_ready((pi_b, v_b))
    pi_b_ref, v_b_ref = reference_forward(state_big, params)
    assert pi_b.shape == (batch_big, n_actions) and v_b.shape == (batch_big, 1)
    assert jnp.allclose(pi_b, pi_b_ref, **TOL)
    assert jnp.allclose(v_b, v_b_ref, **TOL)

    print("KERNEL_OK")
</pallas_src>

<mosaic_0001>
module attributes {stable_mosaic.version = 11 : i64} {
  func.func @actor_critic_kernel(%arg0: i32, %arg1: memref<8x8xbf16, #tpu.memory_space<vmem>>, %arg2: memref<8x256xbf16, #tpu.memory_space<vmem>>, %arg3: memref<256x256xbf16, #tpu.memory_space<vmem>>, %arg4: memref<256x128xbf16, #tpu.memory_space<vmem>>, %arg5: memref<2x256xf32, #tpu.memory_space<vmem>>, %arg6: memref<1x128xf32, #tpu.memory_space<vmem>>, %arg7: memref<8x128xbf16, #tpu.memory_space<vmem>>) attributes {dimension_semantics = [#tpu.dimension_semantics<parallel>], iteration_bounds = array<i64: 1>, scalar_prefetch = 0 : i64, scratch_operands = 0 : i64, tpu.core_type = #tpu.core_type<tc>, window_params = [{transform_indices = @transform_0, window_bounds = array<i64: 8, 8>}, {pipeline_mode = #tpu.pipeline_mode<synchronous>, transform_indices = @transform_1, window_bounds = array<i64: 8, 256>}, {pipeline_mode = #tpu.pipeline_mode<synchronous>, transform_indices = @transform_2, window_bounds = array<i64: 256, 256>}, {pipeline_mode = #tpu.pipeline_mode<synchronous>, transform_indices = @transform_3, window_bounds = array<i64: 256, 128>}, {pipeline_mode = #tpu.pipeline_mode<synchronous>, transform_indices = @transform_4, window_bounds = array<i64: 2, 256>}, {pipeline_mode = #tpu.pipeline_mode<synchronous>, transform_indices = @transform_5, window_bounds = array<i64: 1, 128>}, {transform_indices = @transform_6, window_bounds = array<i64: 8, 128>}]} {
    %c0 = arith.constant 0 : index
    %c0_0 = arith.constant 0 : index
    %0 = vector.load %arg1[%c0, %c0_0] : memref<8x8xbf16, #tpu.memory_space<vmem>>, vector<8x8xbf16>
    %c0_1 = arith.constant 0 : index
    %c0_2 = arith.constant 0 : index
    %1 = vector.load %arg2[%c0_1, %c0_2] : memref<8x256xbf16, #tpu.memory_space<vmem>>, vector<8x256xbf16>
    %cst = arith.constant dense<0.000000e+00> : vector<8x256xf32>
    %2 = tpu.matmul %0, %1, %cst {dimension_numbers = #tpu.dot_dimension_numbers<[1], [0], [0], [1], [0, 0, 1, 1], [], []>} : vector<8x8xbf16>, vector<8x256xbf16>, vector<8x256xf32> -> vector<8x256xf32>
    %c0_3 = arith.constant 0 : index
    %c0_4 = arith.constant 0 : index
    %3 = vector.load %arg5[%c0_3, %c0_4] : memref<2x256xf32, #tpu.memory_space<vmem>>, vector<1x256xf32>
    %4 = vector.broadcast %3 : vector<1x256xf32> to vector<8x256xf32>
    %5 = arith.addf %2, %4 : vector<8x256xf32>
    %cst_5 = arith.constant 0.000000e+00 : f32
    %6 = vector.broadcast %cst_5 : f32 to vector<8x256xf32>
    %7 = arith.maximumf %5, %6 : vector<8x256xf32>
    %8 = arith.truncf %7 : vector<8x256xf32> to vector<8x256xbf16>
    %c0_6 = arith.constant 0 : index
    %c0_7 = arith.constant 0 : index
    %9 = vector.load %arg3[%c0_6, %c0_7] : memref<256x256xbf16, #tpu.memory_space<vmem>>, vector<256x256xbf16>
    %cst_8 = arith.constant dense<0.000000e+00> : vector<8x256xf32>
    %10 = tpu.matmul %8, %9, %cst_8 {dimension_numbers = #tpu.dot_dimension_numbers<[1], [0], [0], [1], [0, 0, 1, 1], [], []>} : vector<8x256xbf16>, vector<256x256xbf16>, vector<8x256xf32> -> vector<8x256xf32>
    %c1 = arith.constant 1 : index
    %c0_9 = arith.constant 0 : index
    %11 = vector.load %arg5[%c1, %c0_9] : memref<2x256xf32, #tpu.memory_space<vmem>>, vector<1x256xf32>
    %12 = vector.broadcast %11 : vector<1x256xf32> to vector<8x256xf32>
    %13 = arith.addf %10, %12 : vector<8x256xf32>
    %cst_10 = arith.constant 0.000000e+00 : f32
    %14 = vector.broadcast %cst_10 : f32 to vector<8x256xf32>
    %15 = arith.maximumf %13, %14 : vector<8x256xf32>
    %16 = arith.truncf %15 : vector<8x256xf32> to vector<8x256xbf16>
    %c0_11 = arith.constant 0 : index
    %c0_12 = arith.constant 0 : index
    %17 = vector.load %arg4[%c0_11, %c0_12] : memref<256x128xbf16, #tpu.memory_space<vmem>>, vector<256x128xbf16>
    %cst_13 = arith.constant dense<0.000000e+00> : vector<8x128xf32>
    %18 = tpu.matmul %16, %17, %cst_13 {dimension_numbers = #tpu.dot_dimension_numbers<[1], [0], [0], [1], [0, 0, 1, 1], [], []>} : vector<8x256xbf16>, vector<256x128xbf16>, vector<8x128xf32> -> vector<8x128xf32>
    %c0_14 = arith.constant 0 : index
    %c0_15 = arith.constant 0 : index
    %19 = vector.load %arg6[%c0_14, %c0_15] : memref<1x128xf32, #tpu.memory_space<vmem>>, vector<1x128xf32>
    %20 = vector.broadcast %19 : vector<1x128xf32> to vector<8x128xf32>
    %21 = arith.addf %18, %20 : vector<8x128xf32>
    %22 = arith.truncf %21 : vector<8x128xf32> to vector<8x128xbf16>
    %c0_16 = arith.constant 0 : index
    %c0_17 = arith.constant 0 : index
    %23 = vector.load %arg7[%c0_16, %c0_17] : memref<8x128xbf16, #tpu.memory_space<vmem>>, vector<8x128xbf16>
    tpu.vector_store %arg7[%c0_16, %c0_17], %22 {strides = array<i32>} : memref<8x128xbf16, #tpu.memory_space<vmem>>, vector<8x128xbf16>,
    return
  }
  func.func @transform_0(%arg0: i32) -> (i32, i32) {
    %c0_i32 = arith.constant 0 : i32
    %c0_i32_0 = arith.constant 0 : i32
    return %arg0, %c0_i32 : i32, i32
  }
  func.func @transform_1(%arg0: i32) -> (i32, i32) {
    %c0_i32 = arith.constant 0 : i32
    %c0_i32_0 = arith.constant 0 : i32
    %c0_i32_1 = arith.constant 0 : i32
    return %c0_i32, %c0_i32_0 : i32, i32
  }
  func.func @transform_2(%arg0: i32) -> (i32, i32) {
    %c0_i32 = arith.constant 0 : i32
    %c0_i32_0 = arith.constant 0 : i32
    %c0_i32_1 = arith.constant 0 : i32
    return %c0_i32, %c0_i32_0 : i32, i32
  }
  func.func @transform_3(%arg0: i32) -> (i32, i32) {
    %c0_i32 = arith.constant 0 : i32
    %c0_i32_0 = arith.constant 0 : i32
    %c0_i32_1 = arith.constant 0 : i32
    return %c0_i32, %c0_i32_0 : i32, i32
  }
  func.func @transform_4(%arg0: i32) -> (i32, i32) {
    %c0_i32 = arith.constant 0 : i32
    %c0_i32_0 = arith.constant 0 : i32
    %c0_i32_1 = arith.constant 0 : i32
    return %c0_i32, %c0_i32_0 : i32, i32
  }
  func.func @transform_5(%arg0: i32) -> (i32, i32) {
    %c0_i32 = arith.constant 0 : i32
    %c0_i32_0 = arith.constant 0 : i32
    %c0_i32_1 = arith.constant 0 : i32
    return %c0_i32, %c0_i32_0 : i32, i32
  }
  func.func @transform_6(%arg0: i32) -> (i32, i32) {
    %c0_i32 = arith.constant 0 : i32
    %c0_i32_0 = arith.constant 0 : i32
    return %arg0, %c0_i32 : i32, i32
  }
}

</mosaic_0001>

<llo_original>
// kernel: actor_critic_forward.1
$region0: #{actor_critic_forward.1}
  #allocation0 [shape = 'u32[]', space=smem, size = 0x4, offset = 0x4, fixed_abs, tag = 'smem constant byte address 0x4 - core index']
  #allocation1 [shape = 'u32[72,128]{1,0:T(1,128)}', space=vmem, size = 0x9000, scoped, tag = 'internal scratch']
  %s0 = inlined_call_operand.vmem [shape: bf16[8,8], index: 0, kind: input, shape index: {}]
  %s1 = inlined_call_operand.vmem [shape: bf16[8,256], index: 1, kind: input, shape index: {}]
  %s2 = inlined_call_operand.hbm [shape: bf16[256,256], index: 2, kind: input, shape index: {}]
  %s3 = inlined_call_operand.hbm [shape: bf16[256,128], index: 3, kind: input, shape index: {}]
  %s4 = inlined_call_operand.vmem [shape: f32[2,256], index: 4, kind: input, shape index: {}]
  %s5 = inlined_call_operand.vmem [shape: f32[1,128], index: 5, kind: input, shape index: {}]
  %s6 = inlined_call_operand.vmem [shape: bf16[8,128], index: 6, kind: output, shape index: {}]
  %s7 = sld [smem:[#allocation0]]
  $region42: #{actor_critic_forward.1} parent=0
    _
  %s9 = ssub.s32 1, %s7
  %s10 = scalar_select 0, %s9, %s7
  $region1: #{actor_critic_forward.1} parent=0
    #allocation2 [shape = 'u8[131072]{0}', space=vmem, size = 0x20000, scoped, tag = 'input window, operand 2, single buffered']
    #allocation3 [shape = 's32[1]{0}', space=sflag, size = 0x4, scoped, tag = 'scoped memory for actor_critic_forward.1']
    #allocation4 [shape = 'u8[65536]{0}', space=vmem, size = 0x10000, scoped, tag = 'input window, operand 3, single buffered']
    #allocation5 [shape = 's32[1]{0}', space=sflag, size = 0x4, scoped, tag = 'scoped memory for actor_critic_forward.1']
    %11 = vsyncpa [#allocation3], 0
    %12 = vsyncpa [#allocation5], 0
    // Predicated region
    $region2: #{actor_critic_forward.1} parent=1 // pred_check
      _
    $region3: #{actor_critic_forward.1} parent=1 // pred_check_branch
      %14 = sbr.rel (0) target = $region5
    $region4: #{actor_critic_forward.1} parent=1 // pred_region
      _
    $region5: #{actor_critic_forward.1} parent=1 // pred_fallthru
      _
    // Predicated region
    $region6: #{actor_critic_forward.1} parent=1 // pred_check
      _
    $region7: #{actor_critic_forward.1} parent=1 // pred_check_branch
      %16 = sbr.rel (0) target = $region9
    $region8: #{actor_critic_forward.1} parent=1 // pred_region
      _
    $region9: #{actor_critic_forward.1} parent=1 // pred_fallthru
      _
    // Predicated region
    $region10: #{actor_critic_forward.1} parent=1 // pred_check
      _
    $region11: #{actor_critic_forward.1} parent=1 // pred_check_branch
      %18 = sbr.rel (0) target = $region13
    $region12: #{actor_critic_forward.1} parent=1 // pred_region
      %20 = vsyncadd [#allocation3], 0
      %s21 = sshll.u32 %s2, 4
      %s22 = int_to_ptr.hbm [resolvable:$true] %s21
      %s23 = sshll.u32 [#allocation2], 4
      %s24 = int_to_ptr.vmem [resolvable:$true] %s23
      %29 = dma.hbm_to_vmem [thread:$0]  %s22, 4096, %s24, [#allocation3], 128, 128, 8
    $region13: #{actor_critic_forward.1} parent=1 // pred_fallthru
      _
    // Predicated region
    $region14: #{actor_critic_forward.1} parent=1 // pred_check
      _
    $region15: #{actor_critic_forward.1} parent=1 // pred_check_branch
      %31 = sbr.rel (0) target = $region17
    $region16: #{actor_critic_forward.1} parent=1 // pred_region
      %33 = vsyncadd [#allocation5], 0
      %s34 = sshll.u32 %s3, 4
      %s35 = int_to_ptr.hbm [resolvable:$true] %s34
      %s36 = sshll.u32 [#allocation4], 4
      %s37 = int_to_ptr.vmem [resolvable:$true] %s36
      %42 = dma.hbm_to_vmem [thread:$0]  %s35, 2048, %s37, [#allocation5], 64, 64, 4
    $region17: #{actor_critic_forward.1} parent=1 // pred_fallthru
      _
    // Predicated region
    $region18: #{actor_critic_forward.1} parent=1 // pred_check
      _
    $region19: #{actor_critic_forward.1} parent=1 // pred_check_branch
      %44 = sbr.rel (0) target = $region21
    $region20: #{actor_critic_forward.1} parent=1 // pred_region
      _
    $region21: #{actor_critic_forward.1} parent=1 // pred_fallthru
      _
    // Predicated region
    $region22: #{actor_critic_forward.1} parent=1 // pred_check
      _
    $region23: #{actor_critic_forward.1} parent=1 // pred_check_branch
      %46 = sbr.rel (0) target = $region25
    $region24: #{actor_critic_forward.1} parent=1 // pred_region
      _
    $region25: #{actor_critic_forward.1} parent=1 // pred_fallthru
      _
    // Predicated region
    $region26: #{actor_critic_forward.1} parent=1 // pred_check
      _
    $region27: #{actor_critic_forward.1} parent=1 // pred_check_branch
      %48 = sbr.rel (0) target = $region29
    $region28: #{actor_critic_forward.1} parent=1 // pred_region
      %50 = dma.done [#allocation3], 4096
    $region29: #{actor_critic_forward.1} parent=1 // pred_fallthru
      _
    // Predicated region
    $region30: #{actor_critic_forward.1} parent=1 // pred_check
      _
    $region31: #{actor_critic_forward.1} parent=1 // pred_check_branch
      %52 = sbr.rel (0) target = $region33
    $region32: #{actor_critic_forward.1} parent=1 // pred_region
      %54 = dma.done [#allocation5], 2048
    $region33: #{actor_critic_forward.1} parent=1 // pred_fallthru
      _
    %v56 = vld [vmem:[%s0] sm:$0xf]
    %v57 = vld [vmem:[%s1] sm:$0xff]
    %v58 = vld [vmem:[%s4] ss:$2 sm:$0x3]
    %v60 = vperm.slane %v58, 0
    %v61 = vperm.slane %v58, 1
    %v65 = vunpack.c.l.b16 %v57
    %v66 = vunpack.c.h.b16 %v57
    %v67 = vpack.c.b16 %v65, %v65
    %v68 = vpack.c.b16 %v66, %v66
    %vm69 = vcmask 64512
    %v71 = vsel %vm69, %v56, 0
    %vm73 = vcmask 1043456
    %v75 = vsel %vm73, %v67, 0
    %v78 = vsel %vm73, %v68, 0
    %80 = vmatpush.bf16.msra.mxu0 0
    %81 = vmatpush.bf16.msra.mxu0 0
    %82 = vmatpush.bf16.msra.mxu0 0
    %83 = vmatpush.bf16.msra.mxu0 0
    %84 = vmatpush.bf16.msra.mxu0 0
    %85 = vmatpush.bf16.msra.mxu0 0
    %86 = vmatpush.bf16.msra.mxu0 0
    %87 = vmatpush.bf16.msra.mxu0 %v75
    %88 = vmatmul.bf16.gmra.mxu0 %v71
    %v89 = vpop.f32.mrf.mxu0
    %v90 = vadd.f32 %v60, %v89
    %v91 = vpop.f32.mrf.mxu0
    %92 = vdwg.mxu0
    %93 = vmatpush.bf16.msra.mxu0 0
    %94 = vmatpush.bf16.msra.mxu0 0
    %95 = vmatpush.bf16.msra.mxu0 0
    %96 = vmatpush.bf16.msra.mxu0 0
    %97 = vmatpush.bf16.msra.mxu0 0
    %98 = vmatpush.bf16.msra.mxu0 0
    %99 = vmatpush.bf16.msra.mxu0 0
    %100 = vmatpush.bf16.msra.mxu0 %v78
    %101 = vmatmul.bf16.gmra.mxu0 %v71
    %v102 = vpop.f32.mrf.mxu0
    %v103 = vadd.f32 %v61, %v102
    %v104 = vpop.f32.mrf.mxu0
    %105 = vdwg.mxu0
    %v106 = vmax.f32 %v90, 0.0
    %v107 = vmax.f32 %v103, 0.0
    %v108 = vpack.c.bf16 %v106, %v106
    %v109 = vpack.c.bf16 %v107, %v107
    %v110 = vld [vmem:[#allocation2] sm:$0xff]
    %v111 = vld [vmem:[#allocation2 + $0x8] sm:$0xff]
    %v112 = vld [vmem:[#allocation2 + $0x10] sm:$0xff]
    %v113 = vld [vmem:[#allocation2 + $0x18] sm:$0xff]
    %v114 = vld [vmem:[#allocation2 + $0x20] sm:$0xff]
    %v115 = vld [vmem:[#allocation2 + $0x28] sm:$0xff]
    %v116 = vld [vmem:[#allocation2 + $0x30] sm:$0xff]
    %v117 = vld [vmem:[#allocation2 + $0x38] sm:$0xff]
    %v118 = vld [vmem:[#allocation2 + $0x40] sm:$0xff]
    %v119 = vld [vmem:[#allocation2 + $0x48] sm:$0xff]
    %v120 = vld [vmem:[#allocation2 + $0x50] sm:$0xff]
    %v121 = vld [vmem:[#allocation2 + $0x58] sm:$0xff]
    %v122 = vld [vmem:[#allocation2 + $0x60] sm:$0xff]
    %v123 = vld [vmem:[#allocation2 + $0x68] sm:$0xff]
    %v124 = vld [vmem:[#allocation2 + $0x70] sm:$0xff]
    %v125 = vld [vmem:[#allocation2 + $0x78] sm:$0xff]
    %v126 = vld [vmem:[#allocation2 + $0x80] sm:$0xff]
    %v127 = vld [vmem:[#allocation2 + $0x88] sm:$0xff]
    %v128 = vld [vmem:[#allocation2 + $0x90] sm:$0xff]
    %v129 = vld [vmem:[#allocation2 + $0x98] sm:$0xff]
    %v130 = vld [vmem:[#allocation2 + $0xa0] sm:$0xff]
    %v131 = vld [vmem:[#allocation2 + $0xa8] sm:$0xff]
    %v132 = vld [vmem:[#allocation2 + $0xb0] sm:$0xff]
    %v133 = vld [vmem:[#allocation2 + $0xb8] sm:$0xff]
    %v134 = vld [vmem:[#allocation2 + $0xc0] sm:$0xff]
    %v135 = vld [vmem:[#allocation2 + $0xc8] sm:$0xff]
    %v136 = vld [vmem:[#allocation2 + $0xd0] sm:$0xff]
    %v137 = vld [vmem:[#allocation2 + $0xd8] sm:$0xff]
    %v138 = vld [vmem:[#allocation2 + $0xe0] sm:$0xff]
    %v139 = vld [vmem:[#allocation2 + $0xe8] sm:$0xff]
    %v140 = vld [vmem:[#allocation2 + $0xf0] sm:$0xff]
    %v141 = vld [vmem:[#allocation2 + $0xf8] sm:$0xff]
    %s142 = scalar_lea.vmem %s4, 1
    %v143 = vld [vmem:[%s142] ss:$2 sm:$0x3]
    %v145 = vperm.slane %v143, 0
    %v146 = vperm.slane %v143, 1
    %v181 = vunpack.c.l.b16 %v110
    %v182 = vunpack.c.h.b16 %v110
    %v183 = vunpack.c.l.b16 %v111
    %v184 = vunpack.c.h.b16 %v111
    %v185 = vunpack.c.l.b16 %v112
    %v186 = vunpack.c.h.b16 %v112
    %v187 = vunpack.c.l.b16 %v113
    %v188 = vunpack.c.h.b16 %v113
    %v189 = vunpack.c.l.b16 %v114
    %v190 = vunpack.c.h.b16 %v114
    %v191 = vunpack.c.l.b16 %v115
    %v192 = vunpack.c.h.b16 %v115
    %v193 = vunpack.c.l.b16 %v116
    %v194 = vunpack.c.h.b16 %v116
    %v195 = vunpack.c.l.b16 %v117
    %v196 = vunpack.c.h.b16 %v117
    %v197 = vunpack.c.l.b16 %v118
    %v198 = vunpack.c.h.b16 %v118
    %v199 = vunpack.c.l.b16 %v119
    %v200 = vunpack.c.h.b16 %v119
    %v201 = vunpack.c.l.b16 %v120
    %v202 = vunpack.c.h.b16 %v120
    %v203 = vunpack.c.l.b16 %v121
    %v204 = vunpack.c.h.b16 %v121
    %v205 = vunpack.c.l.b16 %v122
    %v206 = vunpack.c.h.b16 %v122
    %v207 = vunpack.c.l.b16 %v123
    %v208 = vunpack.c.h.b16 %v123
    %v209 = vunpack.c.l.b16 %v124
    %v210 = vunpack.c.h.b16 %v124
    %v211 = vunpack.c.l.b16 %v125
    %v212 = vunpack.c.h.b16 %v125
    %v213 = vunpack.c.l.b16 %v126
    %v214 = vunpack.c.h.b16 %v126
    %v215 = vunpack.c.l.b16 %v127
    %v216 = vunpack.c.h.b16 %v127
    %v217 = vunpack.c.l.b16 %v128
    %v218 = vunpack.c.h.b16 %v128
    %v219 = vunpack.c.l.b16 %v129
    %v220 = vunpack.c.h.b16 %v129
    %v221 = vunpack.c.l.b16 %v130
    %v222 = vunpack.c.h.b16 %v130
    %v223 = vunpack.c.l.b16 %v131
    %v224 = vunpack.c.h.b16 %v131
    %v225 = vunpack.c.l.b16 %v132
    %v226 = vunpack.c.h.b16 %v132
    %v227 = vunpack.c.l.b16 %v133
    %v228 = vunpack.c.h.b16 %v133
    %v229 = vunpack.c.l.b16 %v134
    %v230 = vunpack.c.h.b16 %v134
    %v231 = vunpack.c.l.b16 %v135
    %v232 = vunpack.c.h.b16 %v135
    %v233 = vunpack.c.l.b16 %v136
    %v234 = vunpack.c.h.b16 %v136
    %v235 = vunpack.c.l.b16 %v137
    %v236 = vunpack.c.h.b16 %v137
    %v237 = vunpack.c.l.b16 %v138
    %v238 = vunpack.c.h.b16 %v138
    %v239 = vunpack.c.l.b16 %v139
    %v240 = vunpack.c.h.b16 %v139
    %v241 = vunpack.c.l.b16 %v140
    %v242 = vunpack.c.h.b16 %v140
    %v243 = vunpack.c.l.b16 %v141
    %v244 = vunpack.c.h.b16 %v141
    %v245 = vpack.c.b16 %v183, %v181
    %v246 = vpack.c.b16 %v184, %v182
    %v247 = vpack.c.b16 %v187, %v185
    %v248 = vpack.c.b16 %v188, %v186
    %v249 = vpack.c.b16 %v191, %v189
    %v250 = vpack.c.b16 %v192, %v190
    %v251 = vpack.c.b16 %v195, %v193
    %v252 = vpack.c.b16 %v196, %v194
    %v253 = vpack.c.b16 %v199, %v197
    %v254 = vpack.c.b16 %v200, %v198
    %v255 = vpack.c.b16 %v203, %v201
    %v256 = vpack.c.b16 %v204, %v202
    %v257 = vpack.c.b16 %v207, %v205
    %v258 = vpack.c.b16 %v208, %v206
    %v259 = vpack.c.b16 %v211, %v209
    %v260 = vpack.c.b16 %v212, %v210
    %v261 = vpack.c.b16 %v215, %v213
    %v262 = vpack.c.b16 %v216, %v214
    %v263 = vpack.c.b16 %v219, %v217
    %v264 = vpack.c.b16 %v220, %v218
    %v265 = vpack.c.b16 %v223, %v221
    %v266 = vpack.c.b16 %v224, %v222
    %v267 = vpack.c.b16 %v227, %v225
    %v268 = vpack.c.b16 %v228, %v226
    %v269 = vpack.c.b16 %v231, %v229
    %v270 = vpack.c.b16 %v232, %v230
    %v271 = vpack.c.b16 %v235, %v233
    %v272 = vpack.c.b16 %v236, %v234
    %v273 = vpack.c.b16 %v239, %v237
    %v274 = vpack.c.b16 %v240, %v238
    %v275 = vpack.c.b16 %v243, %v241
    %v276 = vpack.c.b16 %v244, %v242
    %309 = vmatpush.bf16.msra.mxu0 %v259
    %310 = vmatpush.bf16.msra.mxu0 %v257
    %311 = vmatpush.bf16.msra.mxu0 %v255
    %312 = vmatpush.bf16.msra.mxu0 %v253
    %313 = vmatpush.bf16.msra.mxu0 %v251
    %314 = vmatpush.bf16.msra.mxu0 %v249
    %315 = vmatpush.bf16.msra.mxu0 %v247
    %316 = vmatpush.bf16.msra.mxu0 %v245
    %317 = vmatmul.bf16.gmra.mxu0 %v108
    %v318 = vpop.f32.mrf.mxu0
    %v319 = vadd.f32 %v145, %v318
    %v320 = vpop.f32.mrf.mxu0
    %321 = vdwg.mxu0
    %322 = vmatpush.bf16.msra.mxu0 %v275
    %323 = vmatpush.bf16.msra.mxu0 %v273
    %324 = vmatpush.bf16.msra.mxu0 %v271
    %325 = vmatpush.bf16.msra.mxu0 %v269
    %326 = vmatpush.bf16.msra.mxu0 %v267
    %327 = vmatpush.bf16.msra.mxu0 %v265
    %328 = vmatpush.bf16.msra.mxu0 %v263
    %329 = vmatpush.bf16.msra.mxu0 %v261
    %330 = vmatmul.bf16.gmra.mxu0 %v109
    %v331 = vpop.f32.mrf.mxu0
    %v332 = vadd.f32 %v319, %v331
    %v333 = vpop.f32.mrf.mxu0
    %334 = vdwg.mxu0
    %335 = vmatpush.bf16.msra.mxu0 %v260
    %336 = vmatpush.bf16.msra.mxu0 %v258
    %337 = vmatpush.bf16.msra.mxu0 %v256
    %338 = vmatpush.bf16.msra.mxu0 %v254
    %339 = vmatpush.bf16.msra.mxu0 %v252
    %340 = vmatpush.bf16.msra.mxu0 %v250
    %341 = vmatpush.bf16.msra.mxu0 %v248
    %342 = vmatpush.bf16.msra.mxu0 %v246
    %343 = vmatmul.bf16.gmra.mxu0 %v108
    %v344 = vpop.f32.mrf.mxu0
    %v345 = vadd.f32 %v146, %v344
    %v346 = vpop.f32.mrf.mxu0
    %347 = vdwg.mxu0
    %348 = vmatpush.bf16.msra.mxu0 %v276
    %349 = vmatpush.bf16.msra.mxu0 %v274
    %350 = vmatpush.bf16.msra.mxu0 %v272
    %351 = vmatpush.bf16.msra.mxu0 %v270
    %352 = vmatpush.bf16.msra.mxu0 %v268
    %353 = vmatpush.bf16.msra.mxu0 %v266
    %354 = vmatpush.bf16.msra.mxu0 %v264
    %355 = vmatpush.bf16.msra.mxu0 %v262
    %356 = vmatmul.bf16.gmra.mxu0 %v109
    %v357 = vpop.f32.mrf.mxu0
    %v358 = vadd.f32 %v345, %v357
    %v359 = vpop.f32.mrf.mxu0
    %360 = vdwg.mxu0
    %v361 = vmax.f32 %v332, 0.0
    %v362 = vmax.f32 %v358, 0.0
    %v363 = vpack.c.bf16 %v361, %v361
    %v364 = vpack.c.bf16 %v362, %v362
    %v365 = vld [vmem:[#allocation4] sm:$0xf]
    %v366 = vld [vmem:[#allocation4 + $0x4] sm:$0xf]
    %v367 = vld [vmem:[#allocation4 + $0x8] sm:$0xf]
    %v368 = vld [vmem:[#allocation4 + $0xc] sm:$0xf]
    %v369 = vld [vmem:[#allocation4 + $0x10] sm:$0xf]
    %v370 = vld [vmem:[#allocation4 + $0x14] sm:$0xf]
    %v371 = vld [vmem:[#allocation4 + $0x18] sm:$0xf]
    %v372 = vld [vmem:[#allocation4 + $0x1c] sm:$0xf]
    %v373 = vld [vmem:[#allocation4 + $0x20] sm:$0xf]
    %v374 = vld [vmem:[#allocation4 + $0x24] sm:$0xf]
    %v375 = vld [vmem:[#allocation4 + $0x28] sm:$0xf]
    %v376 = vld [vmem:[#allocation4 + $0x2c] sm:$0xf]
    %v377 = vld [vmem:[#allocation4 + $0x30] sm:$0xf]
    %v378 = vld [vmem:[#allocation4 + $0x34] sm:$0xf]
    %v379 = vld [vmem:[#allocation4 + $0x38] sm:$0xf]
    %v380 = vld [vmem:[#allocation4 + $0x3c] sm:$0xf]
    %v381 = vld [vmem:[#allocation4 + $0x40] sm:$0xf]
    %v382 = vld [vmem:[#allocation4 + $0x44] sm:$0xf]
    %v383 = vld [vmem:[#allocation4 + $0x48] sm:$0xf]
    %v384 = vld [vmem:[#allocation4 + $0x4c] sm:$0xf]
    %v385 = vld [vmem:[#allocation4 + $0x50] sm:$0xf]
    %v386 = vld [vmem:[#allocation4 + $0x54] sm:$0xf]
    %v387 = vld [vmem:[#allocation4 + $0x58] sm:$0xf]
    %v388 = vld [vmem:[#allocation4 + $0x5c] sm:$0xf]
    %v389 = vld [vmem:[#allocation4 + $0x60] sm:$0xf]
    %v390 = vld [vmem:[#allocation4 + $0x64] sm:$0xf]
    %v391 = vld [vmem:[#allocation4 + $0x68] sm:$0xf]
    %v392 = vld [vmem:[#allocation4 + $0x6c] sm:$0xf]
    %v393 = vld [vmem:[#allocation4 + $0x70] sm:$0xf]
    %v394 = vld [vmem:[#allocation4 + $0x74] sm:$0xf]
    %v395 = vld [vmem:[#allocation4 + $0x78] sm:$0xf]
    %v396 = vld [vmem:[#allocation4 + $0x7c] sm:$0xf]
    %v397 = vld [vmem:[%s5] sm:$0x1]
    %v399 = vperm.slane %v397, 0
    %v433 = vunpack.c.l.b16 %v365
    %v434 = vunpack.c.l.b16 %v366
    %v435 = vunpack.c.l.b16 %v367
    %v436 = vunpack.c.l.b16 %v368
    %v437 = vunpack.c.l.b16 %v369
    %v438 = vunpack.c.l.b16 %v370
    %v439 = vunpack.c.l.b16 %v371
    %v440 = vunpack.c.l.b16 %v372
    %v441 = vunpack.c.l.b16 %v373
    %v442 = vunpack.c.l.b16 %v374
    %v443 = vunpack.c.l.b16 %v375
    %v444 = vunpack.c.l.b16 %v376
    %v445 = vunpack.c.l.b16 %v377
    %v446 = vunpack.c.l.b16 %v378
    %v447 = vunpack.c.l.b16 %v379
    %v448 = vunpack.c.l.b16 %v380
    %v449 = vunpack.c.l.b16 %v381
    %v450 = vunpack.c.l.b16 %v382
    %v451 = vunpack.c.l.b16 %v383
    %v452 = vunpack.c.l.b16 %v384
    %v453 = vunpack.c.l.b16 %v385
    %v454 = vunpack.c.l.b16 %v386
    %v455 = vunpack.c.l.b16 %v387
    %v456 = vunpack.c.l.b16 %v388
    %v457 = vunpack.c.l.b16 %v389
    %v458 = vunpack.c.l.b16 %v390
    %v459 = vunpack.c.l.b16 %v391
    %v460 = vunpack.c.l.b16 %v392
    %v461 = vunpack.c.l.b16 %v393
    %v462 = vunpack.c.l.b16 %v394
    %v463 = vunpack.c.l.b16 %v395
    %v464 = vunpack.c.l.b16 %v396
    %v465 = vpack.c.b16 %v434, %v433
    %v466 = vpack.c.b16 %v436, %v435
    %v467 = vpack.c.b16 %v438, %v437
    %v468 = vpack.c.b16 %v440, %v439
    %v469 = vpack.c.b16 %v442, %v441
    %v470 = vpack.c.b16 %v444, %v443
    %v471 = vpack.c.b16 %v446, %v445
    %v472 = vpack.c.b16 %v448, %v447
    %v473 = vpack.c.b16 %v450, %v449
    %v474 = vpack.c.b16 %v452, %v451
    %v475 = vpack.c.b16 %v454, %v453
    %v476 = vpack.c.b16 %v456, %v455
    %v477 = vpack.c.b16 %v458, %v457
    %v478 = vpack.c.b16 %v460, %v459
    %v479 = vpack.c.b16 %v462, %v461
    %v480 = vpack.c.b16 %v464, %v463
    %497 = vmatpush.bf16.msra.mxu0 %v472
    %498 = vmatpush.bf16.msra.mxu0 %v471
    %499 = vmatpush.bf16.msra.mxu0 %v470
    %500 = vmatpush.bf16.msra.mxu0 %v469
    %501 = vmatpush.bf16.msra.mxu0 %v468
    %502 = vmatpush.bf16.msra.mxu0 %v467
    %503 = vmatpush.bf16.msra.mxu0 %v466
    %504 = vmatpush.bf16.msra.mxu0 %v465
    %505 = vmatmul.bf16.gmra.mxu0 %v363
    %v506 = vpop.f32.mrf.mxu0
    %v507 = vadd.f32 %v399, %v506
    %v508 = vpop.f32.mrf.mxu0
    %509 = vdwg.mxu0
    %510 = vmatpush.bf16.msra.mxu0 %v480
    %511 = vmatpush.bf16.msra.mxu0 %v479
    %512 = vmatpush.bf16.msra.mxu0 %v478
    %513 = vmatpush.bf16.msra.mxu0 %v477
    %514 = vmatpush.bf16.msra.mxu0 %v476
    %515 = vmatpush.bf16.msra.mxu0 %v475
    %516 = vmatpush.bf16.msra.mxu0 %v474
    %517 = vmatpush.bf16.msra.mxu0 %v473
    %518 = vmatmul.bf16.gmra.mxu0 %v364
    %v519 = vpop.f32.mrf.mxu0
    %v520 = vadd.f32 %v507, %v519
    %v521 = vpop.f32.mrf.mxu0
    %522 = vdwg.mxu0
    %v523 = vpack.c.bf16 %v520, %v520
    %524 = vst [vmem:[%s6] sm:$0xf] %v523
    // Predicated region
    $region34: #{actor_critic_forward.1} parent=1 // pred_check
      _
    $region35: #{actor_critic_forward.1} parent=1 // pred_check_branch
      %526 = sbr.rel (0) target = $region37
    $region36: #{actor_critic_forward.1} parent=1 // pred_region
      _
    $region37: #{actor_critic_forward.1} parent=1 // pred_fallthru
      _
    // Predicated region
    $region38: #{actor_critic_forward.1} parent=1 // pred_check
      _
    $region39: #{actor_critic_forward.1} parent=1 // pred_check_branch
      %528 = sbr.rel (0) target = $region41
    $region40: #{actor_critic_forward.1} parent=1 // pred_region
      _
    $region41: #{actor_critic_forward.1} parent=1 // pred_fallthru
      _
    %529 = vsyncpa [#allocation3], 1
    %530 = vsyncpa [#allocation5], 1

</llo_original>
